<compile_context>
chip_gen: v6e
topology: v6e:2x2x1
jax: 0.10.0
libtpu: 0.0.40
codegen_flags: <defaults>
</compile_context>

<pallas_src>
import functools

import jax
import jax.numpy as jnp
import numpy as np
from jax.experimental import pallas as pl
from jax.experimental.pallas import tpu as pltpu

DIM = 2          # flow dimensionality (Flow(dim=2))
HIDDEN = 64      # hidden width (Flow(h=64))
OUT_PAD = 128    # padded output features for forward (>= DIM); 128 => lane-dense stores
MAX_TB = 2048    # max batch-tile rows per grid step (VMEM per step stays ~a few MiB)


# --------------------------------------------------------------------------------------
# In-kernel helpers
# --------------------------------------------------------------------------------------
def _elu(x):
    # ELU(alpha=1).  Negative branch is expm1(x); Mosaic has no expm1 lowering, so use
    # exp(x)-1 away from zero and a 3-term Taylor near zero to kill the cancellation
    # (relative error < ~4e-6 across the seam at |x| = 0.03).
    taylor = x * (1.0 + x * (0.5 + x * (1.0 / 6.0)))
    em1 = jnp.where(x > -0.03, taylor, jnp.exp(x) - 1.0)
    return jnp.where(x > 0.0, x, em1)


def _l1_contrib(x, w):
    """sum_d x[:, d:d+1] * w[d:d+1, :]  -- tiny-K "matmul" as VPU broadcast-FMAs."""
    acc = x[:, 0:1] * w[0:1, :]
    for d in range(1, w.shape[0]):
        acc = acc + x[:, d:d + 1] * w[d:d + 1, :]
    return acc


def _mlp_head(h1, w2, b2, w3, b3, w4, b4, *, bf16):
    """ELU -> Linear -> ELU -> Linear -> ELU -> Linear, given the layer-1 pre-activation.

    bf16=True casts the matmul operands to bfloat16 (f32 accumulation) -- MXU cadence win
    on v6e/v7x; keep False for strict f32 parity.
    """
    dt = jnp.bfloat16 if bf16 else jnp.float32
    h = _elu(h1)
    h = _elu(jnp.dot(h.astype(dt), w2.astype(dt),
                     preferred_element_type=jnp.float32) + b2)
    h = _elu(jnp.dot(h.astype(dt), w3.astype(dt),
                     preferred_element_type=jnp.float32) + b3)
    return jnp.dot(h.astype(dt), w4.astype(dt),
                   preferred_element_type=jnp.float32) + b4


def _unpack_small(pk, dim):
    """Slice the packed (2*dim+4, h) array: [w1_t | w1_x | w1_c | b1 | b2 | b3]."""
    w1t = pk[0:1, :]
    w1x = pk[1:1 + dim, :]
    w1c = pk[1 + dim:1 + 2 * dim, :]
    b1 = pk[1 + 2 * dim:2 + 2 * dim, :]
    b2 = pk[2 + 2 * dim:3 + 2 * dim, :]
    b3 = pk[3 + 2 * dim:4 + 2 * dim, :]
    return w1t, w1x, w1c, b1, b2, b3


# --------------------------------------------------------------------------------------
# Kernel 1: fused forward (optionally with in-kernel, row-stacked CFG)
# --------------------------------------------------------------------------------------
def _flow_forward_kernel(*refs, use_guidance, bf16):
    if use_guidance:
        (g_ref, t_ref, x_ref, c_ref, null_ref,
         pk_ref, w2_ref, w3_ref, w4_ref, b4_ref, o_ref) = refs
    else:
        (t_ref, x_ref, c_ref,
         pk_ref, w2_ref, w3_ref, w4_ref, b4_ref, o_ref) = refs

    dim = x_ref.shape[1]
    w1t, w1x, w1c, b1, b2, b3 = _unpack_small(pk_ref[...], dim)
    w2, w3, w4, b4 = w2_ref[...], w3_ref[...], w4_ref[...], b4_ref[...]

    base = b1 + t_ref[...] * w1t + _l1_contrib(x_ref[...], w1x)        # (TB, H)
    cond = base + _l1_contrib(c_ref[...], w1c)                          # (TB, H)

    if use_guidance:
        tb = cond.shape[0]
        uncond = base + _l1_contrib(null_ref[...], w1c)                 # (TB, H) via bcast
        # Stack the two CFG branches along rows -> ONE matmul chain (half the MXU pushes)
        y = _mlp_head(jnp.concatenate([cond, uncond], axis=0),
                      w2, b2, w3, b3, w4, b4, bf16=bf16)                # (2*TB, OUT)
        y_c, y_u = y[:tb], y[tb:]
        out = y_u + g_ref[0] * (y_c - y_u)                              # CFG combine
    else:
        out = _mlp_head(cond, w2, b2, w3, b3, w4, b4, bf16=bf16)
    o_ref[...] = out.astype(o_ref.dtype)


# --------------------------------------------------------------------------------------
# Kernel 2: fully fused RK2 (midpoint) step -- two velocity evals + updates in VMEM
# --------------------------------------------------------------------------------------
def _flow_step_kernel(*refs, unconditional, bf16):
    if unconditional:
        (s_ref, x_ref, null_ref,
         pk_ref, w2_ref, w3_ref, w4_ref, b4_ref, o_ref) = refs
        c_ref = None
    else:
        (s_ref, x_ref, c_ref, null_ref,
         pk_ref, w2_ref, w3_ref, w4_ref, b4_ref, o_ref) = refs

    t0, t_mid, dt, g = s_ref[0], s_ref[1], s_ref[2], s_ref[3]
    x = x_ref[...]                                                       # (TB, dim)
    tb, dim = x.shape
    w1t, w1x, w1c, b1, b2, b3 = _unpack_small(pk_ref[...], dim)
    w2, w3, w4, b4 = w2_ref[...], w3_ref[...], w4_ref[...], b4_ref[...]

    # Condition / null layer-1 contributions are identical for both RK stages.
    null_contrib = _l1_contrib(null_ref[...], w1c)                       # (1, H)
    cond_contrib = null_contrib if unconditional else _l1_contrib(c_ref[...], w1c)

    def velocity(t_scalar, x_val):
        base = b1 + t_scalar * w1t + _l1_contrib(x_val, w1x)             # (TB, H)
        if unconditional:
            y = _mlp_head(base + cond_contrib, w2, b2, w3, b3, w4, b4, bf16=bf16)
            return y[:, :dim]
        # Row-stacked CFG: one matmul chain for both branches.
        y = _mlp_head(jnp.concatenate([base + cond_contrib,
                                       base + null_contrib], axis=0),    # (2*TB, H)
                      w2, b2, w3, b3, w4, b4, bf16=bf16)
        y_c, y_u = y[:tb, :dim], y[tb:, :dim]
        return y_u + g * (y_c - y_u)

    k1 = velocity(t0, x)                         # (TB, dim)
    x_mid = x + (0.5 * dt) * k1                  # narrow FMA; never touches HBM
    k2 = velocity(t_mid, x_mid)
    o_ref[...] = (x + dt * k2).astype(o_ref.dtype)   # narrow (TB, dim) store


# --------------------------------------------------------------------------------------
# Wrappers
# --------------------------------------------------------------------------------------
def _round_up(n, m):
    return ((n + m - 1) // m) * m


def _prep_batch(batch):
    """Pad batch to a multiple of 8, pick a tile, re-pad so grid = padded/tb exactly."""
    bp = _round_up(max(batch, 8), 8)
    if bp <= 256:
        tb = bp                                    # launch-bound: one block
    else:
        # >= 2 grid entries so both v7x TensorCores get work; cap at MAX_TB so v5e/v6e
        # still amortize per-grid-step overhead with big tiles.
        tb = min(MAX_TB, _round_up(pl.cdiv(bp, 2), 8))
    bp = _round_up(bp, tb)
    return bp, tb, bp // tb


def _pad_rows(a, rows):
    if a.shape[0] == rows:
        return a
    return jnp.pad(a, ((0, rows - a.shape[0]),) + ((0, 0),) * (a.ndim - 1))


def _row_spec(tb, cols):
    return pl.BlockSpec((tb, cols), lambda i: (i, 0))


def _rep_spec(rows, cols):
    # Constant index_map: block identical across grid steps -> stays resident in VMEM.
    return pl.BlockSpec((rows, cols), lambda i: (0, 0))


def _weight_specs(params):
    pk = params["pk"]
    h = params["w2"].shape[0]
    out_pad = params["w4p"].shape[1]
    return [_rep_spec(pk.shape[0], h),   # packed [w1_t|w1_x|w1_c|b1|b2|b3]
            _rep_spec(h, h),             # w2
            _rep_spec(h, h),             # w3
            _rep_spec(h, out_pad),       # w4p
            _rep_spec(1, out_pad)]       # b4p


def _weight_args(params):
    return (params["pk"], params["w2"], params["w3"], params["w4p"], params["b4p"])


def _weight_bytes(params):
    return sum(int(v.size) * v.dtype.itemsize for v in _weight_args(params))


def _net_cost(params, batch, n_evals, io_floats_per_row):
    dim = params["null_embed"].shape[1]
    h = params["w2"].shape[0]
    out_pad = params["w4p"].shape[1]
    flops = 2 * batch * n_evals * (h * (2 * dim + 1) + 2 * h * h + h * out_pad)
    transcendentals = batch * n_evals * 3 * h                     # one exp per ELU elem
    bytes_accessed = batch * io_floats_per_row * 4 + _weight_bytes(params)
    return pl.CostEstimate(flops=flops, transcendentals=transcendentals,
                           bytes_accessed=bytes_accessed)


@functools.partial(jax.jit, static_argnames=("use_guidance", "bf16"))
def flow_forward(params, t, x_t, condition, guidance=1.0, use_guidance=False, bf16=False):
    """Eval-mode Flow.forward (one fused Pallas kernel, CFG row-stacked in-kernel)."""
    # TODO(synk): training-mode torch.rand condition dropout not reproduced (eval only).
    batch, dim = x_t.shape
    out_pad = params["w4p"].shape[1]
    bp, tb, grid = _prep_batch(batch)

    t_p = _pad_rows(t.astype(jnp.float32), bp)
    x_p = _pad_rows(x_t.astype(jnp.float32), bp)
    c_p = _pad_rows(condition.astype(jnp.float32), bp)

    smem = pl.BlockSpec(memory_space=pltpu.MemorySpace.SMEM)
    data_specs = [_row_spec(tb, 1), _row_spec(tb, dim), _row_spec(tb, dim)]
    if use_guidance:
        g = jnp.full((1,), guidance, jnp.float32)
        in_specs = [smem] + data_specs + [_rep_spec(1, dim)] + _weight_specs(params)
        call_args = [g, t_p, x_p, c_p, params["null_embed"], *_weight_args(params)]
    else:
        in_specs = data_specs + _weight_specs(params)
        call_args = [t_p, x_p, c_p, *_weight_args(params)]

    out = pl.pallas_call(
        functools.partial(_flow_forward_kernel, use_guidance=use_guidance, bf16=bf16),
        out_shape=jax.ShapeDtypeStruct((bp, out_pad), jnp.float32),
        grid=(grid,),
        in_specs=in_specs,
        out_specs=_row_spec(tb, out_pad),
        compiler_params=pltpu.CompilerParams(dimension_semantics=("parallel",)),
        cost_estimate=_net_cost(params, bp, 2 if use_guidance else 1,
                                1 + 2 * dim + out_pad),
    )(*call_args)
    return out[:batch, :dim]


@functools.partial(jax.jit, static_argnames=("unconditional", "bf16"))
def flow_step(params, x_t, t_start, t_end, condition, guidance=1.0,
              unconditional=False, bf16=False):
    """Flow.step (midpoint / RK2 integrator), fully fused into ONE Pallas kernel."""
    batch, dim = x_t.shape
    bp, tb, grid = _prep_batch(batch)

    t_start = jnp.asarray(t_start, jnp.float32)
    t_end = jnp.asarray(t_end, jnp.float32)
    dt = t_end - t_start
    scalars = jnp.stack([t_start, t_start + 0.5 * dt, dt,
                         jnp.asarray(guidance, jnp.float32)])

    x_p = _pad_rows(x_t.astype(jnp.float32), bp)
    c_p = _pad_rows(condition.astype(jnp.float32), bp)

    smem = pl.BlockSpec(memory_space=pltpu.MemorySpace.SMEM)
    if unconditional:
        in_specs = [smem, _row_spec(tb, dim), _rep_spec(1, dim)] + _weight_specs(params)
        call_args = [scalars, x_p, params["null_embed"], *_weight_args(params)]
    else:
        in_specs = ([smem, _row_spec(tb, dim), _row_spec(tb, dim), _rep_spec(1, dim)]
                    + _weight_specs(params))
        call_args = [scalars, x_p, c_p, params["null_embed"], *_weight_args(params)]

    n_evals = 2 * (1 if unconditional else 2)
    out = pl.pallas_call(
        functools.partial(_flow_step_kernel, unconditional=unconditional, bf16=bf16),
        out_shape=jax.ShapeDtypeStruct((bp, dim), jnp.float32),
        grid=(grid,),
        in_specs=in_specs,
        out_specs=_row_spec(tb, dim),                 # narrow writeback (64x less HBM)
        compiler_params=pltpu.CompilerParams(dimension_semantics=("parallel",)),
        cost_estimate=_net_cost(params, bp, n_evals, 3 * dim),
    )(*call_args)
    return out[:batch]


# --------------------------------------------------------------------------------------
# Parameters (nn.Linear-default init), stored kernel-friendly:
#   * weights are (in_features, out_features) so the kernel computes x @ W + b
#   * small tensors packed as pk = [w1_t | w1_x | w1_c | b1 | b2 | b3]  ((2*dim+4, h))
#   * layer-4 weight/bias zero-padded to `out_pad` columns (lane-dense forward stores)
# --------------------------------------------------------------------------------------
def init_flow_params(key, dim=DIM, h=HIDDEN, out_pad=OUT_PAD):
    assert out_pad >= dim
    in_feats = 2 * dim + 1

    def linear(k, fin, fout):
        kw, kb = jax.random.split(k)
        bound = float(fin) ** -0.5
        w = jax.random.uniform(kw, (fin, fout), jnp.float32, -bound, bound)
        b = jax.random.uniform(kb, (1, fout), jnp.float32, -bound, bound)
        return w, b

    k1, k2, k3, k4 = jax.random.split(key, 4)
    w1, b1 = linear(k1, in_feats, h)        # rows ordered [t | x (dim) | c (dim)]
    w2, b2 = linear(k2, h, h)
    w3, b3 = linear(k3, h, h)
    w4, b4 = linear(k4, h, dim)
    pk = jnp.concatenate([w1, b1, b2, b3], axis=0)          # (2*dim+4, h)
    w4p = jnp.zeros((h, out_pad), jnp.float32).at[:, :dim].set(w4)
    b4p = jnp.zeros((1, out_pad), jnp.float32).at[:, :dim].set(b4)
    return {"null_embed": jnp.zeros((1, dim), jnp.float32),
            "pk": pk, "w2": w2, "w3": w3, "w4p": w4p, "b4p": b4p}


# --------------------------------------------------------------------------------------
# Pure-JAX reference (for correctness checking only)
# --------------------------------------------------------------------------------------
def _ref_unpack(params):
    dim = params["null_embed"].shape[1]
    pk = params["pk"]
    w1 = pk[:2 * dim + 1]
    b1 = pk[2 * dim + 1:2 * dim + 2]
    b2 = pk[2 * dim + 2:2 * dim + 3]
    b3 = pk[2 * dim + 3:2 * dim + 4]
    return dim, w1, b1, b2, b3


def _reference_forward(params, t, x_t, condition, guidance=1.0, use_guidance=False):
    hi = jax.lax.Precision.HIGHEST
    dim, w1, b1, b2, b3 = _ref_unpack(params)
    w4 = params["w4p"][:, :dim]
    b4 = params["b4p"][:, :dim]

    def net(t_, x_, c_):
        z = jnp.concatenate([t_, x_, c_], axis=-1)
        a = jax.nn.elu(jnp.dot(z, w1, precision=hi) + b1)
        a = jax.nn.elu(jnp.dot(a, params["w2"], precision=hi) + b2)
        a = jax.nn.elu(jnp.dot(a, params["w3"], precision=hi) + b3)
        return jnp.dot(a, w4, precision=hi) + b4

    y_c = net(t, x_t, condition)
    if not use_guidance:
        return y_c
    y_u = net(t, x_t, jnp.broadcast_to(params["null_embed"], condition.shape))
    return y_u + guidance * (y_c - y_u)


def _reference_step(params, x_t, t_start, t_end, condition, guidance=1.0,
                    unconditional=False):
    batch = x_t.shape[0]
    dt = t_end - t_start
    t0 = jnp.full((batch, 1), t_start, jnp.float32)
    tm = jnp.full((batch, 1), t_start + 0.5 * dt, jnp.float32)
    if unconditional:
        condition = jnp.broadcast_to(params["null_embed"], condition.shape)
    k1 = _reference_forward(params, t0, x_t, condition, guidance, not unconditional)
    x_mid = x_t + 0.5 * dt * k1
    k2 = _reference_forward(params, tm, x_mid, condition, guidance, not unconditional)
    return x_t + dt * k2


# --------------------------------------------------------------------------------------
if __name__ == "__main__":
    key = jax.random.PRNGKey(0)
    kp, kx, kc = jax.random.split(key, 3)

    B = 8
    params = init_flow_params(kp)
    t = jnp.full((B, 1), 0.25, dtype=jnp.float32)
    x_t = jax.random.normal(kx, (B, DIM), jnp.float32)
    condition = jax.random.normal(kc, (B, DIM), jnp.float32)

    # Plain forward.
    out = jax.block_until_ready(flow_forward(params, t, x_t, condition))
    assert out.shape == (B, DIM) and out.dtype == jnp.float32
    np.testing.assert_allclose(out, _reference_forward(params, t, x_t, condition),
                               rtol=5e-4, atol=5e-5)

    # Guided forward (in-kernel row-stacked classifier-free-guidance).
    out_g = jax.block_until_ready(
        flow_forward(params, t, x_t, condition, guidance=2.0, use_guidance=True))
    np.testing.assert_allclose(
        out_g, _reference_forward(params, t, x_t, condition, 2.0, True),
        rtol=5e-4, atol=5e-5)

    # One fully fused RK2 step (guided) and one unconditional step.
    x_next = jax.block_until_ready(
        flow_step(params, x_t, 0.0, 0.1, condition, guidance=1.5))
    assert x_next.shape == (B, DIM)
    np.testing.assert_allclose(
        x_next, _reference_step(params, x_t, 0.0, 0.1, condition, 1.5, False),
        rtol=5e-4, atol=5e-5)

    x_next_u = jax.block_until_ready(
        flow_step(params, x_t, 0.0, 0.1, condition, unconditional=True))
    np.testing.assert_allclose(
        x_next_u, _reference_step(params, x_t, 0.0, 0.1, condition, 1.0, True),
        rtol=5e-4, atol=5e-5)

    # Ragged batch (wrapper pads to a multiple of 8, output sliced back).
    Br = 5
    tr, xr, cr = t[:Br], x_t[:Br], condition[:Br]
    out_r = jax.block_until_ready(
        flow_forward(params, tr, xr, cr, guidance=2.0, use_guidance=True))
    np.testing.assert_allclose(out_r, _reference_forward(params, tr, xr, cr, 2.0, True),
                               rtol=5e-4, atol=5e-5)

    # Multi-tile batch (grid >= 2 so v7x's second TensorCore gets work).
    Bm = 320
    km_x, km_c = jax.random.split(jax.random.PRNGKey(1))
    tm_ = jnp.full((Bm, 1), 0.6, jnp.float32)
    xm = jax.random.normal(km_x, (Bm, DIM), jnp.float32)
    cm = jax.random.normal(km_c, (Bm, DIM), jnp.float32)
    out_m = jax.block_until_ready(
        flow_forward(params, tm_, xm, cm, guidance=2.0, use_guidance=True))
    np.testing.assert_allclose(out_m, _reference_forward(params, tm_, xm, cm, 2.0, True),
                               rtol=5e-4, atol=5e-5)
    x_next_m = jax.block_until_ready(flow_step(params, xm, 0.0, 0.1, cm, guidance=1.5))
    np.testing.assert_allclose(
        x_next_m, _reference_step(params, xm, 0.0, 0.1, cm, 1.5, False),
        rtol=5e-4, atol=5e-5)

    # bf16 matmul knob (v6e/v7x MXU cadence win) -- loose smoke check only.
    out_bf16 = jax.block_until_ready(
        flow_forward(params, t, x_t, condition, guidance=2.0, use_guidance=True,
                     bf16=True))
    np.testing.assert_allclose(
        out_bf16, _reference_forward(params, t, x_t, condition, 2.0, True),
        rtol=5e-2, atol=1e-2)
    x_next_bf16 = jax.block_until_ready(
        flow_step(params, x_t, 0.0, 0.1, condition, guidance=1.5, bf16=True))
    np.testing.assert_allclose(
        x_next_bf16, _reference_step(params, x_t, 0.0, 0.1, condition, 1.5, False),
        rtol=5e-2, atol=1e-2)

    # OUT_PAD knob: out_pad = dim (minimal HBM writeback variant for large batches).
    params_n = init_flow_params(kp, out_pad=DIM)
    out_n = jax.block_until_ready(
        flow_forward(params_n, t, x_t, condition, guidance=2.0, use_guidance=True))
    np.testing.assert_allclose(
        out_n, _reference_forward(params_n, t, x_t, condition, 2.0, True),
        rtol=5e-4, atol=5e-5)
    x_next_n = jax.block_until_ready(
        flow_step(params_n, x_t, 0.0, 0.1, condition, guidance=1.5))
    np.testing.assert_allclose(
        x_next_n, _reference_step(params_n, x_t, 0.0, 0.1, condition, 1.5, False),
        rtol=5e-4, atol=5e-5)

    print("KERNEL_OK")
</pallas_src>

<mosaic_0001>
module attributes {stable_mosaic.version = 11 : i64} {
  func.func @_flow_forward_kernel(%arg0: i32, %arg1: memref<8x1xf32, #tpu.memory_space<vmem>>, %arg2: memref<8x2xf32, #tpu.memory_space<vmem>>, %arg3: memref<8x2xf32, #tpu.memory_space<vmem>>, %arg4: memref<8x64xf32, #tpu.memory_space<vmem>>, %arg5: memref<64x64xf32, #tpu.memory_space<vmem>>, %arg6: memref<64x64xf32, #tpu.memory_space<vmem>>, %arg7: memref<64x128xf32, #tpu.memory_space<vmem>>, %arg8: memref<1x128xf32, #tpu.memory_space<vmem>>, %arg9: memref<8x128xf32, #tpu.memory_space<vmem>>) attributes {dimension_semantics = [#tpu.dimension_semantics<parallel>], iteration_bounds = array<i64: 1>, scalar_prefetch = 0 : i64, scratch_operands = 0 : i64, tpu.core_type = #tpu.core_type<tc>, window_params = [{transform_indices = @transform_0, window_bounds = array<i64: 8, 1>}, {transform_indices = @transform_1, window_bounds = array<i64: 8, 2>}, {transform_indices = @transform_2, window_bounds = array<i64: 8, 2>}, {pipeline_mode = #tpu.pipeline_mode<synchronous>, transform_indices = @transform_3, window_bounds = array<i64: 8, 64>}, {pipeline_mode = #tpu.pipeline_mode<synchronous>, transform_indices = @transform_4, window_bounds = array<i64: 64, 64>}, {pipeline_mode = #tpu.pipeline_mode<synchronous>, transform_indices = @transform_5, window_bounds = array<i64: 64, 64>}, {pipeline_mode = #tpu.pipeline_mode<synchronous>, transform_indices = @transform_6, window_bounds = array<i64: 64, 128>}, {pipeline_mode = #tpu.pipeline_mode<synchronous>, transform_indices = @transform_7, window_bounds = array<i64: 1, 128>}, {transform_indices = @transform_8, window_bounds = array<i64: 8, 128>}]} {
    %c0 = arith.constant 0 : index
    %c0_0 = arith.constant 0 : index
    %0 = vector.load %arg4[%c0, %c0_0] : memref<8x64xf32, #tpu.memory_space<vmem>>, vector<8x64xf32>
    %1 = vector.extract_strided_slice %0 {offsets = [0, 0], sizes = [1, 64], strides = [1, 1]} : vector<8x64xf32> to vector<1x64xf32>
    %2 = vector.extract_strided_slice %0 {offsets = [1, 0], sizes = [2, 64], strides = [1, 1]} : vector<8x64xf32> to vector<2x64xf32>
    %3 = vector.extract_strided_slice %0 {offsets = [3, 0], sizes = [2, 64], strides = [1, 1]} : vector<8x64xf32> to vector<2x64xf32>
    %4 = vector.extract_strided_slice %0 {offsets = [5, 0], sizes = [1, 64], strides = [1, 1]} : vector<8x64xf32> to vector<1x64xf32>
    %5 = vector.extract_strided_slice %0 {offsets = [6, 0], sizes = [1, 64], strides = [1, 1]} : vector<8x64xf32> to vector<1x64xf32>
    %6 = vector.extract_strided_slice %0 {offsets = [7, 0], sizes = [1, 64], strides = [1, 1]} : vector<8x64xf32> to vector<1x64xf32>
    %c0_1 = arith.constant 0 : index
    %c0_2 = arith.constant 0 : index
    %7 = vector.load %arg5[%c0_1, %c0_2] : memref<64x64xf32, #tpu.memory_space<vmem>>, vector<64x64xf32>
    %c0_3 = arith.constant 0 : index
    %c0_4 = arith.constant 0 : index
    %8 = vector.load %arg6[%c0_3, %c0_4] : memref<64x64xf32, #tpu.memory_space<vmem>>, vector<64x64xf32>
    %c0_5 = arith.constant 0 : index
    %c0_6 = arith.constant 0 : index
    %9 = vector.load %arg7[%c0_5, %c0_6] : memref<64x128xf32, #tpu.memory_space<vmem>>, vector<64x128xf32>
    %c0_7 = arith.constant 0 : index
    %c0_8 = arith.constant 0 : index
    %10 = vector.load %arg8[%c0_7, %c0_8] : memref<1x128xf32, #tpu.memory_space<vmem>>, vector<1x128xf32>
    %c0_9 = arith.constant 0 : index
    %c0_10 = arith.constant 0 : index
    %11 = vector.load %arg1[%c0_9, %c0_10] : memref<8x1xf32, #tpu.memory_space<vmem>>, vector<8x1xf32>
    %12 = vector.broadcast %11 : vector<8x1xf32> to vector<8x64xf32>
    %13 = vector.broadcast %1 : vector<1x64xf32> to vector<8x64xf32>
    %14 = arith.mulf %12, %13 : vector<8x64xf32>
    %15 = vector.broadcast %4 : vector<1x64xf32> to vector<8x64xf32>
    %16 = arith.addf %15, %14 : vector<8x64xf32>
    %c0_11 = arith.constant 0 : index
    %c0_12 = arith.constant 0 : index
    %17 = vector.load %arg2[%c0_11, %c0_12] : memref<8x2xf32, #tpu.memory_space<vmem>>, vector<8x2xf32>
    %18 = vector.extract_strided_slice %17 {offsets = [0, 0], sizes = [8, 1], strides = [1, 1]} : vector<8x2xf32> to vector<8x1xf32>
    %19 = vector.extract_strided_slice %2 {offsets = [0, 0], sizes = [1, 64], strides = [1, 1]} : vector<2x64xf32> to vector<1x64xf32>
    %20 = vector.broadcast %18 : vector<8x1xf32> to vector<8x64xf32>
    %21 = vector.broadcast %19 : vector<1x64xf32> to vector<8x64xf32>
    %22 = arith.mulf %20, %21 : vector<8x64xf32>
    %23 = vector.extract_strided_slice %17 {offsets = [0, 1], sizes = [8, 1], strides = [1, 1]} : vector<8x2xf32> to vector<8x1xf32>
    %24 = vector.extract_strided_slice %2 {offsets = [1, 0], sizes = [1, 64], strides = [1, 1]} : vector<2x64xf32> to vector<1x64xf32>
    %25 = vector.broadcast %23 : vector<8x1xf32> to vector<8x64xf32>
    %26 = vector.broadcast %24 : vector<1x64xf32> to vector<8x64xf32>
    %27 = arith.mulf %25, %26 : vector<8x64xf32>
    %28 = arith.addf %22, %27 : vector<8x64xf32>
    %29 = arith.addf %16, %28 : vector<8x64xf32>
    %c0_13 = arith.constant 0 : index
    %c0_14 = arith.constant 0 : index
    %30 = vector.load %arg3[%c0_13, %c0_14] : memref<8x2xf32, #tpu.memory_space<vmem>>, vector<8x2xf32>
    %31 = vector.extract_strided_slice %30 {offsets = [0, 0], sizes = [8, 1], strides = [1, 1]} : vector<8x2xf32> to vector<8x1xf32>
    %32 = vector.extract_strided_slice %3 {offsets = [0, 0], sizes = [1, 64], strides = [1, 1]} : vector<2x64xf32> to vector<1x64xf32>
    %33 = vector.broadcast %31 : vector<8x1xf32> to vector<8x64xf32>
    %34 = vector.broadcast %32 : vector<1x64xf32> to vector<8x64xf32>
    %35 = arith.mulf %33, %34 : vector<8x64xf32>
    %36 = vector.extract_strided_slice %30 {offsets = [0, 1], sizes = [8, 1], strides = [1, 1]} : vector<8x2xf32> to vector<8x1xf32>
    %37 = vector.extract_strided_slice %3 {offsets = [1, 0], sizes = [1, 64], strides = [1, 1]} : vector<2x64xf32> to vector<1x64xf32>
    %38 = vector.broadcast %36 : vector<8x1xf32> to vector<8x64xf32>
    %39 = vector.broadcast %37 : vector<1x64xf32> to vector<8x64xf32>
    %40 = arith.mulf %38, %39 : vector<8x64xf32>
    %41 = arith.addf %35, %40 : vector<8x64xf32>
    %42 = arith.addf %29, %41 : vector<8x64xf32>
    %cst = arith.constant 0.166666672 : f32
    %43 = vector.broadcast %cst : f32 to vector<8x64xf32>
    %44 = arith.mulf %42, %43 : vector<8x64xf32>
    %cst_15 = arith.constant 5.000000e-01 : f32
    %45 = vector.broadcast %cst_15 : f32 to vector<8x64xf32>
    %46 = arith.addf %45, %44 : vector<8x64xf32>
    %47 = arith.mulf %42, %46 : vector<8x64xf32>
    %cst_16 = arith.constant 1.000000e+00 : f32
    %48 = vector.broadcast %cst_16 : f32 to vector<8x64xf32>
    %49 = arith.addf %48, %47 : vector<8x64xf32>
    %50 = arith.mulf %42, %49 : vector<8x64xf32>
    %cst_17 = arith.constant -3.000000e-02 : f32
    %51 = vector.broadcast %cst_17 : f32 to vector<8x64xf32>
    %52 = arith.cmpf ogt, %42, %51 : vector<8x64xf32>
    %53 = math.exp %42 : vector<8x64xf32>
    %cst_18 = arith.constant 1.000000e+00 : f32
    %54 = vector.broadcast %cst_18 : f32 to vector<8x64xf32>
    %55 = arith.subf %53, %54 : vector<8x64xf32>
    %56 = arith.select %52, %50, %55 : vector<8x64xi1>, vector<8x64xf32>
    %cst_19 = arith.constant 0.000000e+00 : f32
    %57 = vector.broadcast %cst_19 : f32 to vector<8x64xf32>
    %58 = arith.cmpf ogt, %42, %57 : vector<8x64xf32>
    %59 = arith.select %58, %42, %56 : vector<8x64xi1>, vector<8x64xf32>
    %cst_20 = arith.constant dense<0.000000e+00> : vector<8x64xf32>
    %60 = tpu.matmul %59, %7, %cst_20 {dimension_numbers = #tpu.dot_dimension_numbers<[1], [0], [0], [1], [0, 0, 1, 1], [], []>} : vector<8x64xf32>, vector<64x64xf32>, vector<8x64xf32> -> vector<8x64xf32>
    %61 = vector.broadcast %5 : vector<1x64xf32> to vector<8x64xf32>
    %62 = arith.addf %60, %61 : vector<8x64xf32>
    %cst_21 = arith.constant 0.166666672 : f32
    %63 = vector.broadcast %cst_21 : f32 to vector<8x64xf32>
    %64 = arith.mulf %62, %63 : vector<8x64xf32>
    %cst_22 = arith.constant 5.000000e-01 : f32
    %65 = vector.broadcast %cst_22 : f32 to vector<8x64xf32>
    %66 = arith.addf %65, %64 : vector<8x64xf32>
    %67 = arith.mulf %62, %66 : vector<8x64xf32>
    %cst_23 = arith.constant 1.000000e+00 : f32
    %68 = vector.broadcast %cst_23 : f32 to vector<8x64xf32>
    %69 = arith.addf %68, %67 : vector<8x64xf32>
    %70 = arith.mulf %62, %69 : vector<8x64xf32>
    %cst_24 = arith.constant -3.000000e-02 : f32
    %71 = vector.broadcast %cst_24 : f32 to vector<8x64xf32>
    %72 = arith.cmpf ogt, %62, %71 : vector<8x64xf32>
    %73 = math.exp %62 : vector<8x64xf32>
    %cst_25 = arith.constant 1.000000e+00 : f32
    %74 = vector.broadcast %cst_25 : f32 to vector<8x64xf32>
    %75 = arith.subf %73, %74 : vector<8x64xf32>
    %76 = arith.select %72, %70, %75 : vector<8x64xi1>, vector<8x64xf32>
    %cst_26 = arith.constant 0.000000e+00 : f32
    %77 = vector.broadcast %cst_26 : f32 to vector<8x64xf32>
    %78 = arith.cmpf ogt, %62, %77 : vector<8x64xf32>
    %79 = arith.select %78, %62, %76 : vector<8x64xi1>, vector<8x64xf32>
    %cst_27 = arith.constant dense<0.000000e+00> : vector<8x64xf32>
    %80 = tpu.matmul %79, %8, %cst_27 {dimension_numbers = #tpu.dot_dimension_numbers<[1], [0], [0], [1], [0, 0, 1, 1], [], []>} : vector<8x64xf32>, vector<64x64xf32>, vector<8x64xf32> -> vector<8x64xf32>
    %81 = vector.broadcast %6 : vector<1x64xf32> to vector<8x64xf32>
    %82 = arith.addf %80, %81 : vector<8x64xf32>
    %cst_28 = arith.constant 0.166666672 : f32
    %83 = vector.broadcast %cst_28 : f32 to vector<8x64xf32>
    %84 = arith.mulf %82, %83 : vector<8x64xf32>
    %cst_29 = arith.constant 5.000000e-01 : f32
    %85 = vector.broadcast %cst_29 : f32 to vector<8x64xf32>
    %86 = arith.addf %85, %84 : vector<8x64xf32>
    %87 = arith.mulf %82, %86 : vector<8x64xf32>
    %cst_30 = arith.constant 1.000000e+00 : f32
    %88 = vector.broadcast %cst_30 : f32 to vector<8x64xf32>
    %89 = arith.addf %88, %87 : vector<8x64xf32>
    %90 = arith.mulf %82, %89 : vector<8x64xf32>
    %cst_31 = arith.constant -3.000000e-02 : f32
    %91 = vector.broadcast %cst_31 : f32 to vector<8x64xf32>
    %92 = arith.cmpf ogt, %82, %91 : vector<8x64xf32>
    %93 = math.exp %82 : vector<8x64xf32>
    %cst_32 = arith.constant 1.000000e+00 : f32
    %94 = vector.broadcast %cst_32 : f32 to vector<8x64xf32>
    %95 = arith.subf %93, %94 : vector<8x64xf32>
    %96 = arith.select %92, %90, %95 : vector<8x64xi1>, vector<8x64xf32>
    %cst_33 = arith.constant 0.000000e+00 : f32
    %97 = vector.broadcast %cst_33 : f32 to vector<8x64xf32>
    %98 = arith.cmpf ogt, %82, %97 : vector<8x64xf32>
    %99 = arith.select %98, %82, %96 : vector<8x64xi1>, vector<8x64xf32>
    %cst_34 = arith.constant dense<0.000000e+00> : vector<8x128xf32>
    %100 = tpu.matmul %99, %9, %cst_34 {dimension_numbers = #tpu.dot_dimension_numbers<[1], [0], [0], [1], [0, 0, 1, 1], [], []>} : vector<8x64xf32>, vector<64x128xf32>, vector<8x128xf32> -> vector<8x128xf32>
    %101 = vector.broadcast %10 : vector<1x128xf32> to vector<8x128xf32>
    %102 = arith.addf %100, %101 : vector<8x128xf32>
    %c0_35 = arith.constant 0 : index
    %c0_36 = arith.constant 0 : index
    %103 = vector.load %arg9[%c0_35, %c0_36] : memref<8x128xf32, #tpu.memory_space<vmem>>, vector<8x128xf32>
    tpu.vector_store %arg9[%c0_35, %c0_36], %102 {strides = array<i32>} : memref<8x128xf32, #tpu.memory_space<vmem>>, vector<8x128xf32>,
    return
  }
  func.func @transform_0(%arg0: i32) -> (i32, i32) {
    %c0_i32 = arith.constant 0 : i32
    %c0_i32_0 = arith.constant 0 : i32
    return %arg0, %c0_i32 : i32, i32
  }
  func.func @transform_1(%arg0: i32) -> (i32, i32) {
    %c0_i32 = arith.constant 0 : i32
    %c0_i32_0 = arith.constant 0 : i32
    return %arg0, %c0_i32 : i32, i32
  }
  func.func @transform_2(%arg0: i32) -> (i32, i32) {
    %c0_i32 = arith.constant 0 : i32
    %c0_i32_0 = arith.constant 0 : i32
    return %arg0, %c0_i32 : i32, i32
  }
  func.func @transform_3(%arg0: i32) -> (i32, i32) {
    %c0_i32 = arith.constant 0 : i32
    %c0_i32_0 = arith.constant 0 : i32
    %c0_i32_1 = arith.constant 0 : i32
    return %c0_i32, %c0_i32_0 : i32, i32
  }
  func.func @transform_4(%arg0: i32) -> (i32, i32) {
    %c0_i32 = arith.constant 0 : i32
    %c0_i32_0 = arith.constant 0 : i32
    %c0_i32_1 = arith.constant 0 : i32
    return %c0_i32, %c0_i32_0 : i32, i32
  }
  func.func @transform_5(%arg0: i32) -> (i32, i32) {
    %c0_i32 = arith.constant 0 : i32
    %c0_i32_0 = arith.constant 0 : i32
    %c0_i32_1 = arith.constant 0 : i32
    return %c0_i32, %c0_i32_0 : i32, i32
  }
  func.func @transform_6(%arg0: i32) -> (i32, i32) {
    %c0_i32 = arith.constant 0 : i32
    %c0_i32_0 = arith.constant 0 : i32
    %c0_i32_1 = arith.constant 0 : i32
    return %c0_i32, %c0_i32_0 : i32, i32
  }
  func.func @transform_7(%arg0: i32) -> (i32, i32) {
    %c0_i32 = arith.constant 0 : i32
    %c0_i32_0 = arith.constant 0 : i32
    %c0_i32_1 = arith.constant 0 : i32
    return %c0_i32, %c0_i32_0 : i32, i32
  }
  func.func @transform_8(%arg0: i32) -> (i32, i32) {
    %c0_i32 = arith.constant 0 : i32
    %c0_i32_0 = arith.constant 0 : i32
    return %arg0, %c0_i32 : i32, i32
  }
}

</mosaic_0001>

<llo_original>
// kernel: flow_forward.1
$region0: #{flow_forward.1}
  #allocation0 [shape = 'u32[]', space=smem, size = 0x4, offset = 0x4, fixed_abs, tag = 'smem constant byte address 0x4 - core index']
  #allocation1 [shape = 'u32[144,128]{1,0:T(1,128)}', space=vmem, size = 0x12000, scoped, tag = 'internal scratch']
  %s0 = inlined_call_operand.vmem [shape: f32[8,1], index: 0, kind: input, shape index: {}]
  %s1 = inlined_call_operand.vmem [shape: f32[8,2], index: 1, kind: input, shape index: {}]
  %s2 = inlined_call_operand.vmem [shape: f32[8,2], index: 2, kind: input, shape index: {}]
  %s3 = inlined_call_operand.vmem [shape: f32[8,64], index: 3, kind: input, shape index: {}]
  %s4 = inlined_call_operand.hbm [shape: f32[64,64], index: 4, kind: input, shape index: {}]
  %s5 = inlined_call_operand.hbm [shape: f32[64,64], index: 5, kind: input, shape index: {}]
  %s6 = inlined_call_operand.hbm [shape: f32[64,128], index: 6, kind: input, shape index: {}]
  %s7 = inlined_call_operand.vmem [shape: f32[1,128], index: 7, kind: input, shape index: {}]
  %s8 = inlined_call_operand.vmem [shape: f32[8,128], index: 8, kind: output, shape index: {}]
  %s9 = sld [smem:[#allocation0]]
  $region54: #{flow_forward.1} parent=0
    _
  %s11 = ssub.s32 1, %s9
  %s12 = scalar_select 0, %s11, %s9
  $region1: #{flow_forward.1} parent=0
    #allocation2 [shape = 'u8[32768]{0}', space=vmem, size = 0x8000, scoped, tag = 'input window, operand 4, single buffered']
    #allocation3 [shape = 's32[1]{0}', space=sflag, size = 0x4, scoped, tag = 'scoped memory for flow_forward.1']
    #allocation4 [shape = 'u8[32768]{0}', space=vmem, size = 0x8000, scoped, tag = 'input window, operand 5, single buffered']
    #allocation5 [shape = 's32[1]{0}', space=sflag, size = 0x4, scoped, tag = 'scoped memory for flow_forward.1']
    #allocation6 [shape = 'u8[32768]{0}', space=vmem, size = 0x8000, scoped, tag = 'input window, operand 6, single buffered']
    %13 = vsyncpa [#allocation3], 0
    %14 = vsyncpa [#allocation5], 0
    // Predicated region
    $region2: #{flow_forward.1} parent=1 // pred_check
      _
    $region3: #{flow_forward.1} parent=1 // pred_check_branch
      %16 = sbr.rel (0) target = $region5
    $region4: #{flow_forward.1} parent=1 // pred_region
      _
    $region5: #{flow_forward.1} parent=1 // pred_fallthru
      _
    // Predicated region
    $region6: #{flow_forward.1} parent=1 // pred_check
      _
    $region7: #{flow_forward.1} parent=1 // pred_check_branch
      %18 = sbr.rel (0) target = $region9
    $region8: #{flow_forward.1} parent=1 // pred_region
      _
    $region9: #{flow_forward.1} parent=1 // pred_fallthru
      _
    // Predicated region
    $region10: #{flow_forward.1} parent=1 // pred_check
      _
    $region11: #{flow_forward.1} parent=1 // pred_check_branch
      %20 = sbr.rel (0) target = $region13
    $region12: #{flow_forward.1} parent=1 // pred_region
      _
    $region13: #{flow_forward.1} parent=1 // pred_fallthru
      _
    // Predicated region
    $region14: #{flow_forward.1} parent=1 // pred_check
      _
    $region15: #{flow_forward.1} parent=1 // pred_check_branch
      %22 = sbr.rel (0) target = $region17
    $region16: #{flow_forward.1} parent=1 // pred_region
      _
    $region17: #{flow_forward.1} parent=1 // pred_fallthru
      _
    // Predicated region
    $region18: #{flow_forward.1} parent=1 // pred_check
      _
    $region19: #{flow_forward.1} parent=1 // pred_check_branch
      %24 = sbr.rel (0) target = $region21
    $region20: #{flow_forward.1} parent=1 // pred_region
      %s26 = ssub.s32 1024, 1024
      %27 = vsyncadd [#allocation3], %s26
      %s28 = sshll.u32 [#allocation2], 4
      %s29 = int_to_ptr.vmem [resolvable:$true] %s28
      %34 = dma.hbm_to_vmem [thread:$0]  %s4, 1024, %s29, [#allocation3], 128, 128, 8
    $region21: #{flow_forward.1} parent=1 // pred_fallthru
      _
    // Predicated region
    $region22: #{flow_forward.1} parent=1 // pred_check
      _
    $region23: #{flow_forward.1} parent=1 // pred_check_branch
      %36 = sbr.rel (0) target = $region25
    $region24: #{flow_forward.1} parent=1 // pred_region
      %s38 = ssub.s32 1024, 1024
      %39 = vsyncadd [#allocation5], %s38
      %s40 = sshll.u32 [#allocation4], 4
      %s41 = int_to_ptr.vmem [resolvable:$true] %s40
      %46 = dma.hbm_to_vmem [thread:$0]  %s5, 1024, %s41, [#allocation5], 128, 128, 8
    $region25: #{flow_forward.1} parent=1 // pred_fallthru
      _
    // Predicated region
    $region26: #{flow_forward.1} parent=1 // pred_check
      _
    $region27: #{flow_forward.1} parent=1 // pred_check_branch
      %48 = sbr.rel (0) target = $region29
    $region28: #{flow_forward.1} parent=1 // pred_region
      %s50 = ssub.s32 1024, 1024
      %51 = vsyncadd [#allocation5], %s50
      %s52 = sshll.u32 [#allocation6], 4
      %s53 = int_to_ptr.vmem [resolvable:$true] %s52
      %58 = dma.hbm_to_vmem [thread:$0]  %s6, 1024, %s53, [#allocation5], 128, 128, 8
    $region29: #{flow_forward.1} parent=1 // pred_fallthru
      _
    // Predicated region
    $region30: #{flow_forward.1} parent=1 // pred_check
      _
    $region31: #{flow_forward.1} parent=1 // pred_check_branch
      %60 = sbr.rel (0) target = $region33
    $region32: #{flow_forward.1} parent=1 // pred_region
      _
    $region33: #{flow_forward.1} parent=1 // pred_fallthru
      _
    // Predicated region
    $region34: #{flow_forward.1} parent=1 // pred_check
      _
    $region35: #{flow_forward.1} parent=1 // pred_check_branch
      %62 = sbr.rel (0) target = $region37
    $region36: #{flow_forward.1} parent=1 // pred_region
      %63 = dma.done [#allocation3], 1024
    $region37: #{flow_forward.1} parent=1 // pred_fallthru
      _
    // Predicated region
    $region38: #{flow_forward.1} parent=1 // pred_check
      _
    $region39: #{flow_forward.1} parent=1 // pred_check_branch
      %65 = sbr.rel (0) target = $region41
    $region40: #{flow_forward.1} parent=1 // pred_region
      %66 = dma.done [#allocation5], 1024
    $region41: #{flow_forward.1} parent=1 // pred_fallthru
      _
    // Predicated region
    $region42: #{flow_forward.1} parent=1 // pred_check
      _
    $region43: #{flow_forward.1} parent=1 // pred_check_branch
      %68 = sbr.rel (0) target = $region45
    $region44: #{flow_forward.1} parent=1 // pred_region
      %69 = dma.done [#allocation5], 1024
    $region45: #{flow_forward.1} parent=1 // pred_fallthru
      _
    %v70 = vld [vmem:[%s3] sm:$0xff]
    %v71 = vld [vmem:[#allocation2] sm:$0xff]
    %v72 = vld [vmem:[#allocation2 + $0x8] sm:$0xff]
    %v73 = vld [vmem:[#allocation2 + $0x10] sm:$0xff]
    %v74 = vld [vmem:[#allocation2 + $0x18] sm:$0xff]
    %v75 = vld [vmem:[#allocation2 + $0x20] sm:$0xff]
    %v76 = vld [vmem:[#allocation2 + $0x28] sm:$0xff]
    %v77 = vld [vmem:[#allocation2 + $0x30] sm:$0xff]
    %v78 = vld [vmem:[#allocation2 + $0x38] sm:$0xff]
    %v79 = vld [vmem:[#allocation4] sm:$0xff]
    %v80 = vld [vmem:[#allocation4 + $0x8] sm:$0xff]
    %v81 = vld [vmem:[#allocation4 + $0x10] sm:$0xff]
    %v82 = vld [vmem:[#allocation4 + $0x18] sm:$0xff]
    %v83 = vld [vmem:[#allocation4 + $0x20] sm:$0xff]
    %v84 = vld [vmem:[#allocation4 + $0x28] sm:$0xff]
    %v85 = vld [vmem:[#allocation4 + $0x30] sm:$0xff]
    %v86 = vld [vmem:[#allocation4 + $0x38] sm:$0xff]
    %v87 = vld [vmem:[#allocation6] sm:$0xff]
    %v88 = vld [vmem:[#allocation6 + $0x8] sm:$0xff]
    %v89 = vld [vmem:[#allocation6 + $0x10] sm:$0xff]
    %v90 = vld [vmem:[#allocation6 + $0x18] sm:$0xff]
    %v91 = vld [vmem:[#allocation6 + $0x20] sm:$0xff]
    %v92 = vld [vmem:[#allocation6 + $0x28] sm:$0xff]
    %v93 = vld [vmem:[#allocation6 + $0x30] sm:$0xff]
    %v94 = vld [vmem:[#allocation6 + $0x38] sm:$0xff]
    %v95 = vld [vmem:[%s7] sm:$0x1]
    %v96 = vld [vmem:[%s0] sm:$0xff]
    %98 = vset.pattern.permute.xlu0 0
    %99 = vperm.xlu0 %98, %v96
    %v100 = vpop.permute.xlu0 %99
    %v102 = vlaneseq
    %v103 = vshrl.u32 %v102, 7
    %v104 = vsub.s32 0, %v103
    %v105 = vrot.slane %v70, %v104
    %v106 = vmul.f32 %v100, %v105
    %v107 = vlaneseq
    %v108 = vshrl.u32 %v107, 7
    %v109 = vsub.s32 5, %v108
    %v110 = vrot.slane %v70, %v109
    %v111 = vadd.f32 %v110, %v106
    %v112 = vld [vmem:[%s1] sm:$0xff]
    %114 = vset.pattern.permute.xlu0 0
    %115 = vperm.xlu0 %114, %v112
    %v116 = vpop.permute.xlu0 %115
    %v118 = vlaneseq
    %v119 = vshrl.u32 %v118, 7
    %v120 = vsub.s32 1, %v119
    %v121 = vrot.slane %v70, %v120
    %v122 = vmul.f32 %v116, %v121
    %123 = vset.pattern.permute.xlu0 1
    %124 = vperm.xlu0 %123, %v112
    %v125 = vpop.permute.xlu0 %124
    %v127 = vlaneseq
    %v128 = vshrl.u32 %v127, 7
    %v129 = vsub.s32 2, %v128
    %v130 = vrot.slane %v70, %v129
    %v131 = vmul.f32 %v125, %v130
    %v132 = vadd.f32 %v122, %v131
    %v133 = vadd.f32 %v111, %v132
    %v134 = vld [vmem:[%s2] sm:$0xff]
    %136 = vset.pattern.permute.xlu0 0
    %137 = vperm.xlu0 %136, %v134
    %v138 = vpop.permute.xlu0 %137
    %v140 = vlaneseq
    %v141 = vshrl.u32 %v140, 7
    %v142 = vsub.s32 3, %v141
    %v143 = vrot.slane %v70, %v142
    %v144 = vmul.f32 %v138, %v143
    %145 = vset.pattern.permute.xlu0 1
    %146 = vperm.xlu0 %145, %v134
    %v147 = vpop.permute.xlu0 %146
    %v149 = vlaneseq
    %v150 = vshrl.u32 %v149, 7
    %v151 = vsub.s32 4, %v150
    %v152 = vrot.slane %v70, %v151
    %v153 = vmul.f32 %v147, %v152
    %v154 = vadd.f32 %v144, %v153
    %v155 = vadd.f32 %v133, %v154
    %v156 = vmul.f32 %v155, 0.16666667
    %v157 = vadd.f32 %v156, 0.5
    %v158 = vmul.f32 %v155, %v157
    %v159 = vadd.f32 %v158, 1.0
    %v160 = vmul.f32 %v155, %v159
    %vm161 = vcmp.gt.f32.partialorder %v155, -0.03
    %v162 = vmul.f32 %v155, 1.442695
    %v163 = vpow.pop %v162
    %v164 = vsub.f32 %v163, 1.0
    %v165 = vsel %vm161, %v160, %v164
    %vm166 = vcmp.gt.f32.partialorder %v155, 0.0
    %v167 = vsel %vm166, %v155, %v165
    %v168 = vlaneseq
    %v169 = vshrl.u32 %v168, 7
    %v170 = vsub.s32 6, %v169
    %v171 = vrot.slane %v70, %v170
    %vm172 = vcmask 523264
    %v174 = vsel %vm172, %v167, 0
    %176 = vmatprep.subr.mxu0 0.0
    %177 = vmatpush1.msra.mxu0 0.0
    %178 = vmatprep.subr.mxu0 0.0
    %179 = vmatpush1.msra.mxu0 0.0
    %180 = vmatprep.subr.mxu0 0.0
    %181 = vmatpush1.msra.mxu0 0.0
    %182 = vmatprep.subr.mxu0 0.0
    %183 = vmatpush1.msra.mxu0 0.0
    %184 = vmatprep.subr.mxu0 0.0
    %185 = vmatpush1.msra.mxu0 0.0
    %186 = vmatprep.subr.mxu0 0.0
    %187 = vmatpush1.msra.mxu0 0.0
    %188 = vmatprep.subr.mxu0 0.0
    %189 = vmatpush1.msra.mxu0 0.0
    %190 = vmatprep.subr.mxu0 0.0
    %191 = vmatpush1.msra.mxu0 0.0
    %192 = vmatprep.subr.mxu0 0.0
    %193 = vmatpush1.msra.mxu0 %v78
    %194 = vmatprep.subr.mxu0 0.0
    %195 = vmatpush1.msra.mxu0 %v77
    %196 = vmatprep.subr.mxu0 0.0
    %197 = vmatpush1.msra.mxu0 %v76
    %198 = vmatprep.subr.mxu0 0.0
    %199 = vmatpush1.msra.mxu0 %v75
    %200 = vmatprep.subr.mxu0 0.0
    %201 = vmatpush1.msra.mxu0 %v74
    %202 = vmatprep.subr.mxu0 0.0
    %203 = vmatpush1.msra.mxu0 %v73
    %204 = vmatprep.subr.mxu0 0.0
    %205 = vmatpush1.msra.mxu0 %v72
    %206 = vmatprep.subr.mxu0 0.0
    %207 = vmatpush1.msra.mxu0 %v71
    %208 = vmatprep.subr.mxu0 0.0
    %209 = vmatpush2.msra.mxu0 0.0
    %210 = vmatprep.subr.mxu0 0.0
    %211 = vmatpush2.msra.mxu0 0.0
    %212 = vmatprep.subr.mxu0 0.0
    %213 = vmatpush2.msra.mxu0 0.0
    %214 = vmatprep.subr.mxu0 0.0
    %215 = vmatpush2.msra.mxu0 0.0
    %216 = vmatprep.subr.mxu0 0.0
    %217 = vmatpush2.msra.mxu0 0.0
    %218 = vmatprep.subr.mxu0 0.0
    %219 = vmatpush2.msra.mxu0 0.0
    %220 = vmatprep.subr.mxu0 0.0
    %221 = vmatpush2.msra.mxu0 0.0
    %222 = vmatprep.subr.mxu0 0.0
    %223 = vmatpush2.msra.mxu0 0.0
    %224 = vmatprep.subr.mxu0 0.0
    %225 = vmatpush2.msra.mxu0 0.0
    %226 = vmatprep.subr.mxu0 0.0
    %227 = vmatpush2.msra.mxu0 0.0
    %228 = vmatprep.subr.mxu0 0.0
    %229 = vmatpush2.msra.mxu0 0.0
    %230 = vmatprep.subr.mxu0 0.0
    %231 = vmatpush2.msra.mxu0 0.0
    %232 = vmatprep.subr.mxu0 0.0
    %233 = vmatpush2.msra.mxu0 0.0
    %234 = vmatprep.subr.mxu0 0.0
    %235 = vmatpush2.msra.mxu0 0.0
    %236 = vmatprep.subr.mxu0 0.0
    %237 = vmatpush2.msra.mxu0 0.0
    %238 = vmatprep.subr.mxu0 0.0
    %239 = vmatpush2.msra.mxu0 0.0
    %240 = vmatprep.mubr.f32.mxu0 0.0
    %241 = vmatmul.mubr.f32.gmra.mxu0 %v174
    %v242 = vpop.f32.mrf.mxu0
    %v243 = vadd.f32 %v171, %v242
    %v244 = vpop.f32.mrf.mxu0
    %245 = vdwg.mxu0
    %v246 = vmul.f32 %v243, 0.16666667
    %v247 = vadd.f32 %v246, 0.5
    %v248 = vmul.f32 %v243, %v247
    %v249 = vadd.f32 %v248, 1.0
    %v250 = vmul.f32 %v243, %v249
    %vm251 = vcmp.gt.f32.partialorder %v243, -0.03
    %v252 = vmul.f32 %v243, 1.442695
    %v253 = vpow.pop %v252
    %v254 = vsub.f32 %v253, 1.0
    %v255 = vsel %vm251, %v250, %v254
    %vm256 = vcmp.gt.f32.partialorder %v243, 0.0
    %v257 = vsel %vm256, %v243, %v255
    %v258 = vlaneseq
    %v259 = vshrl.u32 %v258, 7
    %v260 = vsub.s32 7, %v259
    %v261 = vrot.slane %v70, %v260
    %v263 = vsel %vm172, %v257, 0
    %265 = vmatprep.subr.mxu0 0.0
    %266 = vmatpush1.msra.mxu0 0.0
    %267 = vmatprep.subr.mxu0 0.0
    %268 = vmatpush1.msra.mxu0 0.0
    %269 = vmatprep.subr.mxu0 0.0
    %270 = vmatpush1.msra.mxu0 0.0
    %271 = vmatprep.subr.mxu0 0.0
    %272 = vmatpush1.msra.mxu0 0.0
    %273 = vmatprep.subr.mxu0 0.0
    %274 = vmatpush1.msra.mxu0 0.0
    %275 = vmatprep.subr.mxu0 0.0
    %276 = vmatpush1.msra.mxu0 0.0
    %277 = vmatprep.subr.mxu0 0.0
    %278 = vmatpush1.msra.mxu0 0.0
    %279 = vmatprep.subr.mxu0 0.0
    %280 = vmatpush1.msra.mxu0 0.0
    %281 = vmatprep.subr.mxu0 0.0
    %282 = vmatpush1.msra.mxu0 %v86
    %283 = vmatprep.subr.mxu0 0.0
    %284 = vmatpush1.msra.mxu0 %v85
    %285 = vmatprep.subr.mxu0 0.0
    %286 = vmatpush1.msra.mxu0 %v84
    %287 = vmatprep.subr.mxu0 0.0
    %288 = vmatpush1.msra.mxu0 %v83
    %289 = vmatprep.subr.mxu0 0.0
    %290 = vmatpush1.msra.mxu0 %v82
    %291 = vmatprep.subr.mxu0 0.0
    %292 = vmatpush1.msra.mxu0 %v81
    %293 = vmatprep.subr.mxu0 0.0
    %294 = vmatpush1.msra.mxu0 %v80
    %295 = vmatprep.subr.mxu0 0.0
    %296 = vmatpush1.msra.mxu0 %v79
    %297 = vmatprep.subr.mxu0 0.0
    %298 = vmatpush2.msra.mxu0 0.0
    %299 = vmatprep.subr.mxu0 0.0
    %300 = vmatpush2.msra.mxu0 0.0
    %301 = vmatprep.subr.mxu0 0.0
    %302 = vmatpush2.msra.mxu0 0.0
    %303 = vmatprep.subr.mxu0 0.0
    %304 = vmatpush2.msra.mxu0 0.0
    %305 = vmatprep.subr.mxu0 0.0
    %306 = vmatpush2.msra.mxu0 0.0
    %307 = vmatprep.subr.mxu0 0.0
    %308 = vmatpush2.msra.mxu0 0.0
    %309 = vmatprep.subr.mxu0 0.0
    %310 = vmatpush2.msra.mxu0 0.0
    %311 = vmatprep.subr.mxu0 0.0
    %312 = vmatpush2.msra.mxu0 0.0
    %313 = vmatprep.subr.mxu0 0.0
    %314 = vmatpush2.msra.mxu0 0.0
    %315 = vmatprep.subr.mxu0 0.0
    %316 = vmatpush2.msra.mxu0 0.0
    %317 = vmatprep.subr.mxu0 0.0
    %318 = vmatpush2.msra.mxu0 0.0
    %319 = vmatprep.subr.mxu0 0.0
    %320 = vmatpush2.msra.mxu0 0.0
    %321 = vmatprep.subr.mxu0 0.0
    %322 = vmatpush2.msra.mxu0 0.0
    %323 = vmatprep.subr.mxu0 0.0
    %324 = vmatpush2.msra.mxu0 0.0
    %325 = vmatprep.subr.mxu0 0.0
    %326 = vmatpush2.msra.mxu0 0.0
    %327 = vmatprep.subr.mxu0 0.0
    %328 = vmatpush2.msra.mxu0 0.0
    %329 = vmatprep.mubr.f32.mxu0 0.0
    %330 = vmatmul.mubr.f32.gmra.mxu0 %v263
    %v331 = vpop.f32.mrf.mxu0
    %v332 = vadd.f32 %v261, %v331
    %v333 = vpop.f32.mrf.mxu0
    %334 = vdwg.mxu0
    %v335 = vmul.f32 %v332, 0.16666667
    %v336 = vadd.f32 %v335, 0.5
    %v337 = vmul.f32 %v332, %v336
    %v338 = vadd.f32 %v337, 1.0
    %v339 = vmul.f32 %v332, %v338
    %vm340 = vcmp.gt.f32.partialorder %v332, -0.03
    %v341 = vmul.f32 %v332, 1.442695
    %v342 = vpow.pop %v341
    %v343 = vsub.f32 %v342, 1.0
    %v344 = vsel %vm340, %v339, %v343
    %vm345 = vcmp.gt.f32.partialorder %v332, 0.0
    %v346 = vsel %vm345, %v332, %v344
    %v348 = vlaneseq
    %v349 = vshrl.u32 %v348, 7
    %v350 = vsub.s32 0, %v349
    %v351 = vrot.slane %v95, %v350
    %v354 = vsel %vm172, %v346, 0
    %356 = vmatprep.subr.mxu0 0.0
    %357 = vmatpush1.msra.mxu0 0.0
    %358 = vmatprep.subr.mxu0 0.0
    %359 = vmatpush1.msra.mxu0 0.0
    %360 = vmatprep.subr.mxu0 0.0
    %361 = vmatpush1.msra.mxu0 0.0
    %362 = vmatprep.subr.mxu0 0.0
    %363 = vmatpush1.msra.mxu0 0.0
    %364 = vmatprep.subr.mxu0 0.0
    %365 = vmatpush1.msra.mxu0 0.0
    %366 = vmatprep.subr.mxu0 0.0
    %367 = vmatpush1.msra.mxu0 0.0
    %368 = vmatprep.subr.mxu0 0.0
    %369 = vmatpush1.msra.mxu0 0.0
    %370 = vmatprep.subr.mxu0 0.0
    %371 = vmatpush1.msra.mxu0 0.0
    %372 = vmatprep.subr.mxu0 0.0
    %373 = vmatpush1.msra.mxu0 %v94
    %374 = vmatprep.subr.mxu0 0.0
    %375 = vmatpush1.msra.mxu0 %v93
    %376 = vmatprep.subr.mxu0 0.0
    %377 = vmatpush1.msra.mxu0 %v92
    %378 = vmatprep.subr.mxu0 0.0
    %379 = vmatpush1.msra.mxu0 %v91
    %380 = vmatprep.subr.mxu0 0.0
    %381 = vmatpush1.msra.mxu0 %v90
    %382 = vmatprep.subr.mxu0 0.0
    %383 = vmatpush1.msra.mxu0 %v89
    %384 = vmatprep.subr.mxu0 0.0
    %385 = vmatpush1.msra.mxu0 %v88
    %386 = vmatprep.subr.mxu0 0.0
    %387 = vmatpush1.msra.mxu0 %v87
    %388 = vmatprep.subr.mxu0 0.0
    %389 = vmatpush2.msra.mxu0 0.0
    %390 = vmatprep.subr.mxu0 0.0
    %391 = vmatpush2.msra.mxu0 0.0
    %392 = vmatprep.subr.mxu0 0.0
    %393 = vmatpush2.msra.mxu0 0.0
    %394 = vmatprep.subr.mxu0 0.0
    %395 = vmatpush2.msra.mxu0 0.0
    %396 = vmatprep.subr.mxu0 0.0
    %397 = vmatpush2.msra.mxu0 0.0
    %398 = vmatprep.subr.mxu0 0.0
    %399 = vmatpush2.msra.mxu0 0.0
    %400 = vmatprep.subr.mxu0 0.0
    %401 = vmatpush2.msra.mxu0 0.0
    %402 = vmatprep.subr.mxu0 0.0
    %403 = vmatpush2.msra.mxu0 0.0
    %404 = vmatprep.subr.mxu0 0.0
    %405 = vmatpush2.msra.mxu0 0.0
    %406 = vmatprep.subr.mxu0 0.0
    %407 = vmatpush2.msra.mxu0 0.0
    %408 = vmatprep.subr.mxu0 0.0
    %409 = vmatpush2.msra.mxu0 0.0
    %410 = vmatprep.subr.mxu0 0.0
    %411 = vmatpush2.msra.mxu0 0.0
    %412 = vmatprep.subr.mxu0 0.0
    %413 = vmatpush2.msra.mxu0 0.0
    %414 = vmatprep.subr.mxu0 0.0
    %415 = vmatpush2.msra.mxu0 0.0
    %416 = vmatprep.subr.mxu0 0.0
    %417 = vmatpush2.msra.mxu0 0.0
    %418 = vmatprep.subr.mxu0 0.0
    %419 = vmatpush2.msra.mxu0 0.0
    %420 = vmatprep.mubr.f32.mxu0 0.0
    %421 = vmatmul.mubr.f32.gmra.mxu0 %v354
    %v422 = vpop.f32.mrf.mxu0
    %v423 = vadd.f32 %v351, %v422
    %v424 = vpop.f32.mrf.mxu0
    %425 = vdwg.mxu0
    %426 = vst [vmem:[%s8] sm:$0xff] %v423
    // Predicated region
    $region46: #{flow_forward.1} parent=1 // pred_check
      _
    $region47: #{flow_forward.1} parent=1 // pred_check_branch
      %428 = sbr.rel (0) target = $region49
    $region48: #{flow_forward.1} parent=1 // pred_region
      _
    $region49: #{flow_forward.1} parent=1 // pred_fallthru
      _
    // Predicated region
    $region50: #{flow_forward.1} parent=1 // pred_check
      _
    $region51: #{flow_forward.1} parent=1 // pred_check_branch
      %430 = sbr.rel (0) target = $region53
    $region52: #{flow_forward.1} parent=1 // pred_region
      _
    $region53: #{flow_forward.1} parent=1 // pred_fallthru
      _
    %431 = vsyncpa [#allocation3], 1
    %432 = vsyncpa [#allocation5], 1

</llo_original>
